<compile_context>
chip_gen: v7x
topology: tpu7x:2x2x1
jax: 0.10.0
libtpu: 0.0.40
codegen_flags: <defaults>
</compile_context>

<pallas_src>
import math

import jax
import jax.numpy as jnp
from jax.experimental import pallas as pl
from jax.experimental.pallas import tpu as pltpu


def _round_up(v, m):
    return (v + m - 1) // m * m


def _pad2d(arr, rows, cols):
    """Zero-pad a 2-D array up to (rows, cols); no copy if already that shape."""
    r, c = arr.shape
    if r == rows and c == cols:
        return arr
    return jnp.pad(arr, ((0, rows - r), (0, cols - c)))


def _mm_kernel(a_ref, b_ref, o_ref, acc_ref):
    """One (TM, TN) output tile; reduction over the k grid axis (last, 'arbitrary')."""
    @pl.when(pl.program_id(2) == 0)
    def _():
        acc_ref[...] = jnp.zeros_like(acc_ref)

    # Cast tiles to bf16 in VMEM (cheap VPU work hidden under DMA), accumulate in f32.
    acc_ref[...] += jnp.dot(a_ref[...].astype(jnp.bfloat16),
                            b_ref[...].astype(jnp.bfloat16),
                            preferred_element_type=jnp.float32)

    @pl.when(pl.program_id(2) == pl.num_programs(2) - 1)
    def _():
        o_ref[...] = acc_ref[...].astype(o_ref.dtype)


def _mm_bias_kernel(a_ref, b_ref, bias_ref, o_ref, acc_ref):
    """Same as _mm_kernel but adds a broadcast bias row on the final k step."""
    @pl.when(pl.program_id(2) == 0)
    def _():
        acc_ref[...] = jnp.zeros_like(acc_ref)

    acc_ref[...] += jnp.dot(a_ref[...].astype(jnp.bfloat16),
                            b_ref[...].astype(jnp.bfloat16),
                            preferred_element_type=jnp.float32)

    @pl.when(pl.program_id(2) == pl.num_programs(2) - 1)
    def _():
        o_ref[...] = (acc_ref[...] + bias_ref[...]).astype(o_ref.dtype)


def pallas_matmul(a, b, bias=None, *, out_dtype=jnp.float32,
                  block_m=512, block_n=512, block_k=512):
    """out = a @ b (+ bias), tiled + pipelined Pallas matmul.

    a: (M, K), b: (K, N), bias: (N,) or None.  Operands stay in their HBM dtype
    and are cast to bf16 inside the kernel; accumulation is f32; output is
    `out_dtype`.  Dims are padded to 128-multiples only when needed.
    """
    M, K = a.shape
    K2, N = b.shape
    assert K == K2, (a.shape, b.shape)

    tm = min(block_m, _round_up(M, 128))
    tn = min(block_n, _round_up(N, 128))
    tk = min(block_k, _round_up(K, 128))
    Mp, Np, Kp = _round_up(M, tm), _round_up(N, tn), _round_up(K, tk)

    a_p = _pad2d(a, Mp, Kp)
    b_p = _pad2d(b, Kp, Np)

    in_specs = [
        pl.BlockSpec((tm, tk), lambda i, j, k: (i, k)),   # a tile
        pl.BlockSpec((tk, tn), lambda i, j, k: (k, j)),   # b tile
    ]
    operands = [a_p, b_p]
    out_itemsize = jnp.dtype(out_dtype).itemsize
    bytes_accessed = (a_p.size * a_p.dtype.itemsize
                      + b_p.size * b_p.dtype.itemsize
                      + Mp * Np * out_itemsize)

    if bias is not None:
        bias_p = jnp.zeros((1, Np), jnp.float32).at[0, :N].set(
            bias.astype(jnp.float32))
        in_specs.append(pl.BlockSpec((1, tn), lambda i, j, k: (0, j)))  # bias row
        operands.append(bias_p)
        bytes_accessed += bias_p.size * 4
        kernel = _mm_bias_kernel
    else:
        kernel = _mm_kernel

    grid = (Mp // tm, Np // tn, Kp // tk)
    cost = pl.CostEstimate(flops=2 * M * K * N, transcendentals=0,
                           bytes_accessed=bytes_accessed)

    out = pl.pallas_call(
        kernel,
        out_shape=jax.ShapeDtypeStruct((Mp, Np), out_dtype),
        grid_spec=pltpu.PrefetchScalarGridSpec(
            num_scalar_prefetch=0,
            grid=grid,
            in_specs=in_specs,
            out_specs=pl.BlockSpec((tm, tn), lambda i, j, k: (i, j)),
            scratch_shapes=[pltpu.VMEM((tm, tn), jnp.float32)],   # f32 accumulator
        ),
        compiler_params=pltpu.CompilerParams(
            # Row/col axes parallel (megacore sharding on v7x), reduction last.
            dimension_semantics=("parallel", "parallel", "arbitrary"),
            # Safe on all generations (>= v5e's default, < v7x's 64 MiB physical).
            vmem_limit_bytes=32 * 1024 * 1024,
        ),
        cost_estimate=cost,
    )(*operands)

    if (Mp, Np) != (M, N):
        out = out[:M, :N]
    return out


def gcn_conv(x, weight, adj, bias=None, *, block_m=512, block_n=512, block_k=512):
    """GCNConv forward: adj @ (dropout(x) @ W) + bias, dropout = identity (eval)."""
    # TODO(synk): training-mode dropout mask not implemented (eval-mode identity).
    N, Fin = x.shape
    Fout = weight.shape[1]
    kw = dict(block_m=block_m, block_n=block_n, block_k=block_k)

    if Fout <= Fin:
        # Feature transform first: the N^2 contraction runs at width Fout.
        h = pallas_matmul(x, weight, out_dtype=jnp.bfloat16, **kw)            # (N, Fout)
        out = pallas_matmul(adj, h, bias=bias, out_dtype=x.dtype, **kw)        # (N, Fout)
    else:
        # Reassociate: (adj @ x) @ W keeps the smaller dim (Fin) on the N^2 matmul.
        t = pallas_matmul(adj, x, out_dtype=jnp.bfloat16, **kw)                # (N, Fin)
        out = pallas_matmul(t, weight, bias=bias, out_dtype=x.dtype, **kw)
    return out


if __name__ == "__main__":
    # Small GCN problem: N nodes, in_channels -> out_channels (eval mode, has_bias).
    N, in_channels, out_channels = 256, 64, 32

    key = jax.random.PRNGKey(0)
    kx, kadj, kw = jax.random.split(key, 3)

    # Deterministic parameter init mirroring the module's __init__:
    #   weight: xavier_uniform_ over (in_channels, out_channels); bias: zeros_.
    bound = math.sqrt(6.0 / (in_channels + out_channels))
    weight = jax.random.uniform(
        kw, (in_channels, out_channels), dtype=jnp.float32,
        minval=-bound, maxval=bound)
    bias = jnp.zeros((out_channels,), dtype=jnp.float32)

    # Example inputs: node features + symmetric normalized-ish dense adjacency.
    x = jax.random.normal(kx, (N, in_channels), dtype=jnp.float32)
    a = jax.random.uniform(kadj, (N, N), dtype=jnp.float32)
    adj = (a + a.T) / (2.0 * N)

    # Use 128-tiles here so the small demo actually exercises the multi-step
    # (row / col / reduction) grid and the accumulator path.
    out = gcn_conv(x, weight, adj, bias, block_m=128, block_n=128, block_k=128)
    out = jax.block_until_ready(out)

    # Reference (plain JAX, f32): same math, dropout in eval mode is identity.
    ref = adj @ (x @ weight) + bias
    assert out.shape == (N, out_channels)
    # bf16 MXU operands + bf16 intermediate with f32 accumulation -> relative check.
    rel_err = jnp.max(jnp.abs(out - ref)) / (jnp.max(jnp.abs(ref)) + 1e-12)
    assert rel_err < 2e-2, f"relative error too large: {rel_err}"

    print("KERNEL_OK")
</pallas_src>

<mosaic_0001>
module attributes {stable_mosaic.version = 11 : i64} {
  func.func @_mm_kernel(%arg0: i32, %arg1: i32, %arg2: i32, %arg3: memref<128x128xf32, #tpu.memory_space<vmem>>, %arg4: memref<128x128xf32, #tpu.memory_space<vmem>>, %arg5: memref<128x128xbf16, #tpu.memory_space<vmem>>, %arg6: memref<128x128xf32, #tpu.memory_space<vmem>>) attributes {dimension_semantics = [#tpu.dimension_semantics<parallel>, #tpu.dimension_semantics<parallel>, #tpu.dimension_semantics<arbitrary>], iteration_bounds = array<i64: 2, 1, 1>, scalar_prefetch = 0 : i64, scratch_operands = 1 : i64, tpu.core_type = #tpu.core_type<tc>, window_params = [{transform_indices = @transform_0, window_bounds = array<i64: 128, 128>}, {transform_indices = @transform_1, window_bounds = array<i64: 128, 128>}, {transform_indices = @transform_2, window_bounds = array<i64: 128, 128>}]} {
    %c0_i32 = arith.constant 0 : i32
    %0 = arith.cmpi eq, %arg2, %c0_i32 : i32
    %1 = arith.extui %0 : i1 to i32
    %c0_i32_0 = arith.constant 0 : i32
    %2 = arith.cmpi ne, %1, %c0_i32_0 : i32
    scf.if %2 {
      %cst_10 = arith.constant 0.000000e+00 : f32
      %14 = vector.broadcast %cst_10 : f32 to vector<128x128xf32>
      %c0_11 = arith.constant 0 : index
      %c0_12 = arith.constant 0 : index
      %15 = vector.load %arg6[%c0_11, %c0_12] : memref<128x128xf32, #tpu.memory_space<vmem>>, vector<128x128xf32>
      tpu.vector_store %arg6[%c0_11, %c0_12], %14 {strides = array<i32>} : memref<128x128xf32, #tpu.memory_space<vmem>>, vector<128x128xf32>,
    } else {
    }
    %c0 = arith.constant 0 : index
    %c0_1 = arith.constant 0 : index
    %3 = vector.load %arg6[%c0, %c0_1] : memref<128x128xf32, #tpu.memory_space<vmem>>, vector<128x128xf32>
    %c0_2 = arith.constant 0 : index
    %c0_3 = arith.constant 0 : index
    %4 = vector.load %arg3[%c0_2, %c0_3] : memref<128x128xf32, #tpu.memory_space<vmem>>, vector<128x128xf32>
    %5 = arith.truncf %4 : vector<128x128xf32> to vector<128x128xbf16>
    %c0_4 = arith.constant 0 : index
    %c0_5 = arith.constant 0 : index
    %6 = vector.load %arg4[%c0_4, %c0_5] : memref<128x128xf32, #tpu.memory_space<vmem>>, vector<128x128xf32>
    %7 = arith.truncf %6 : vector<128x128xf32> to vector<128x128xbf16>
    %cst = arith.constant dense<0.000000e+00> : vector<128x128xf32>
    %8 = tpu.matmul %5, %7, %cst {dimension_numbers = #tpu.dot_dimension_numbers<[1], [0], [0], [1], [0, 0, 1, 1], [], []>} : vector<128x128xbf16>, vector<128x128xbf16>, vector<128x128xf32> -> vector<128x128xf32>
    %9 = arith.addf %3, %8 : vector<128x128xf32>
    %c0_6 = arith.constant 0 : index
    %c0_7 = arith.constant 0 : index
    %10 = vector.load %arg6[%c0_6, %c0_7] : memref<128x128xf32, #tpu.memory_space<vmem>>, vector<128x128xf32>
    tpu.vector_store %arg6[%c0_6, %c0_7], %9 {strides = array<i32>} : memref<128x128xf32, #tpu.memory_space<vmem>>, vector<128x128xf32>,
    %c0_i32_8 = arith.constant 0 : i32
    %11 = arith.cmpi eq, %arg2, %c0_i32_8 : i32
    %12 = arith.extui %11 : i1 to i32
    %c0_i32_9 = arith.constant 0 : i32
    %13 = arith.cmpi ne, %12, %c0_i32_9 : i32
    scf.if %13 {
      %c0_10 = arith.constant 0 : index
      %c0_11 = arith.constant 0 : index
      %14 = vector.load %arg6[%c0_10, %c0_11] : memref<128x128xf32, #tpu.memory_space<vmem>>, vector<128x128xf32>
      %15 = arith.truncf %14 : vector<128x128xf32> to vector<128x128xbf16>
      %c0_12 = arith.constant 0 : index
      %c0_13 = arith.constant 0 : index
      %16 = vector.load %arg5[%c0_12, %c0_13] : memref<128x128xbf16, #tpu.memory_space<vmem>>, vector<128x128xbf16>
      tpu.vector_store %arg5[%c0_12, %c0_13], %15 {strides = array<i32>} : memref<128x128xbf16, #tpu.memory_space<vmem>>, vector<128x128xbf16>,
    } else {
    }
    return
  }
  func.func @transform_0(%arg0: i32, %arg1: i32, %arg2: i32) -> (i32, i32) {
    %c0_i32 = arith.constant 0 : i32
    return %arg0, %arg2 : i32, i32
  }
  func.func @transform_1(%arg0: i32, %arg1: i32, %arg2: i32) -> (i32, i32) {
    %c0_i32 = arith.constant 0 : i32
    return %arg2, %arg1 : i32, i32
  }
  func.func @transform_2(%arg0: i32, %arg1: i32, %arg2: i32) -> (i32, i32) {
    %c0_i32 = arith.constant 0 : i32
    return %arg0, %arg1 : i32, i32
  }
}

</mosaic_0001>

<llo_original>
// kernel: tpu_custom_call.1
$region0: #{tpu_custom_call.1}
  #allocation0 [shape = 'u32[]', space=smem, size = 0x4, offset = 0x4, fixed_abs, tag = 'smem constant byte address 0x4 - core index']
  #allocation1 [shape = 'u32[144,128]{1,0:T(1,128)}', space=vmem, size = 0x12000, scoped, tag = 'internal scratch']
  #allocation2 [shape = 'f32[128,128]{1,0:T(8,128)}', space=vmem, size = 0x10000, scoped, tag = 'scratch operand']
  %s0 = inlined_call_operand.hbm [shape: f32[256,128], index: 0, kind: input, shape index: {}]
  %s1 = inlined_call_operand.hbm [shape: f32[128,128], index: 1, kind: input, shape index: {}]
  %s2 = inlined_call_operand.hbm [shape: bf16[256,128], index: 2, kind: output, shape index: {}]
  %s3 = sld [smem:[#allocation0]]
  $region57: #{tpu_custom_call.1} parent=0
    _
  %s5 = ssub.s32 1, %s3
  %s6 = scalar_select 0, %s5, %s3
  $region1: #{tpu_custom_call.1} parent=0
    #allocation3 [shape = 'u8[131072]{0}', space=vmem, size = 0x20000, scoped, tag = 'input window, operand 0']
    #allocation4 [shape = 's32[2]{0}', space=sflag, size = 0x8, scoped, tag = 'scoped memory for tpu_custom_call.1']
    #allocation5 [shape = 's32[2]{0}', space=sflag, size = 0x8, scoped, tag = 'scoped memory for tpu_custom_call.1']
    #allocation6 [shape = 'u8[65536]{0}', space=vmem, size = 0x10000, scoped, tag = 'input window, operand 1, single buffered']
    #allocation7 [shape = 's32[1]{0}', space=sflag, size = 0x4, scoped, tag = 'scoped memory for tpu_custom_call.1']
    #allocation8 [shape = 'u8[65536]{0}', space=vmem, size = 0x10000, scoped, tag = 'output window, operand 0']
    %7 = vsyncpa [#allocation4], 0
    %s8 = scalar_lea.sflag [#allocation4], 1
    %9 = vsyncpa %s8, 0
    %10 = vsyncpa [#allocation7], 0
    %11 = vsyncpa [#allocation5], 0
    %s12 = scalar_lea.sflag [#allocation5], 1
    %13 = vsyncpa %s12, 0
    loop: start=0, step=1, limit=4
    $region2: #{tpu_custom_call.1} parent=1 // loop_pre_header
      _
    $region3: #{tpu_custom_call.1} parent=1 // loop_header
      %s15 = sphi 0, %s19
      %p16 = scmp.ge.s32.totalorder %s15, 4
      %s22 = sphi 0, %s41
      %s23 = sphi 0, %s37
      %s24 = sphi 0, %s33
      %s25 = sphi 0, %s22
      %s26 = sphi 0, %s23
      %s27 = sphi 0, %s24
      %s28 = sphi 0, %s25
      %s29 = sphi 0, %s26
      %s30 = sphi 0, %s27
      %s46 = sphi 0, %s48
      %s49 = sphi 0, %s46
      %s50 = sphi 0, %s49
      %s66 = sphi 0, %s50
      %s74 = sphi 0, %s76
      %s77 = sphi 0, %s74
      %s78 = sphi 0, %s77
      %s94 = sphi 0, %s78
      %s102 = sphi 0, %s104
      %s105 = sphi 0, %s102
      %s106 = sphi 0, %s105
      %s122 = sphi 0, %s106
    $region4: #{tpu_custom_call.1} parent=1 // loop_header_branch
      %18 = sbr.rel (%p16) target = $region8
    $region5: #{tpu_custom_call.1} parent=1 // loop_body
      %s20 = ssub.s32 %s15, 1
      %s21 = ssub.s32 %s15, 2
      %s31 = sadd.s32 1, %s24
      %p32 = scmp.ge.s32.totalorder %s31, 1
      %s33 = scalar_select %p32, 0, %s31
      %s34 = sadd.s32 1, %s23
      %s35 = scalar_select %p32, %s34, %s23
      %p36 = scmp.ge.s32.totalorder %s35, 1
      %s37 = scalar_select %p36, 0, %s35
      %s38 = sadd.s32 1, %s22
      %s39 = scalar_select %p36, %s38, %s22
      %p40 = scmp.ge.s32.totalorder %s39, 2
      %s41 = scalar_select %p40, 0, %s39
      %s42 = ssub.s32 %s22, %s41
      %s43 = ssub.s32 %s24, %s33
      %s44 = sor.u32 %s42, %s43
      %p45 = scmp.eq.s32.totalorder %s44, 0
      %s47 = sadd.s32 %s46, 1
      %s48 = scalar_select %p45, %s46, %s47
      %p51 = pneg %p45
      %p52 = scmp.eq.s32.totalorder %s15, 1
      %p53 = por %p51, %p52
      %p54 = scmp.ne.s32.totalorder %s46, %s49
      %p55 = scmp.eq.s32.totalorder %s15, 0
      %p56 = por %p54, %p55
      %p57 = scmp.ne.s32.totalorder %s46, %s49
      %p58 = scmp.eq.s32.totalorder %s20, 1
      %p59 = por %p57, %p58
      %p60 = scmp.ne.s32.totalorder %s49, %s50
      %p61 = scmp.eq.s32.totalorder %s20, 0
      %p62 = por %p60, %p61
      %p63 = scmp.ne.s32.totalorder %s49, %s50
      %p64 = scmp.eq.s32.totalorder %s21, 1
      %p65 = por %p63, %p64
      %p67 = scmp.ne.s32.totalorder %s50, %s66
      %p68 = scmp.eq.s32.totalorder %s21, 0
      %p69 = por %p67, %p68
      %s70 = ssub.s32 %s24, %s33
      %s71 = ssub.s32 %s23, %s37
      %s72 = sor.u32 %s70, %s71
      %p73 = scmp.eq.s32.totalorder %s72, 0
      %s75 = sadd.s32 %s74, 1
      %s76 = scalar_select %p73, %s74, %s75
      %p79 = pneg %p73
      %p80 = scmp.eq.s32.totalorder %s15, 1
      %p81 = por %p79, %p80
      %p82 = scmp.ne.s32.totalorder %s74, %s77
      %p83 = scmp.eq.s32.totalorder %s15, 0
      %p84 = por %p82, %p83
      %p85 = scmp.ne.s32.totalorder %s74, %s77
      %p86 = scmp.eq.s32.totalorder %s20, 1
      %p87 = por %p85, %p86
      %p88 = scmp.ne.s32.totalorder %s77, %s78
      %p89 = scmp.eq.s32.totalorder %s20, 0
      %p90 = por %p88, %p89
      %p91 = scmp.ne.s32.totalorder %s77, %s78
      %p92 = scmp.eq.s32.totalorder %s21, 1
      %p93 = por %p91, %p92
      %p95 = scmp.ne.s32.totalorder %s78, %s94
      %p96 = scmp.eq.s32.totalorder %s21, 0
      %p97 = por %p95, %p96
      %s98 = ssub.s32 %s22, %s41
      %s99 = ssub.s32 %s23, %s37
      %s100 = sor.u32 %s98, %s99
      %p101 = scmp.eq.s32.totalorder %s100, 0
      %s103 = sadd.s32 %s102, 1
      %s104 = scalar_select %p101, %s102, %s103
      %p107 = pneg %p101
      %p108 = scmp.eq.s32.totalorder %s15, 1
      %p109 = por %p107, %p108
      %p110 = scmp.ne.s32.totalorder %s102, %s105
      %p111 = scmp.eq.s32.totalorder %s15, 0
      %p112 = por %p110, %p111
      %p113 = scmp.ne.s32.totalorder %s102, %s105
      %p114 = scmp.eq.s32.totalorder %s20, 1
      %p115 = por %p113, %p114
      %p116 = scmp.ne.s32.totalorder %s105, %s106
      %p117 = scmp.eq.s32.totalorder %s20, 0
      %p118 = por %p116, %p117
      %p119 = scmp.ne.s32.totalorder %s105, %s106
      %p120 = scmp.eq.s32.totalorder %s21, 1
      %p121 = por %p119, %p120
      %p123 = scmp.ne.s32.totalorder %s106, %s122
      %p124 = scmp.eq.s32.totalorder %s21, 0
      %p125 = por %p123, %p124
      %p126 = scmp.le.s32.totalorder 1, %s15
      %p127 = scmp.lt.s32.totalorder %s15, 3
      %p128 = pnand %p126, %p127
      %p129 = pneg %p128
      // Predicated region
      $region9: #{tpu_custom_call.1} parent=5 // pred_check
        _
      $region10: #{tpu_custom_call.1} parent=5 // pred_check_branch
        %131 = sbr.rel (%p128) target = $region12
      $region11: #{tpu_custom_call.1} parent=5 // pred_region
        %s132 = ssub.s32 %s15, 1
        // Predicated region
        $region13: #{tpu_custom_call.1} parent=11 // pred_check
          %p133 = pneg %p90
        $region14: #{tpu_custom_call.1} parent=11 // pred_check_branch
          %135 = sbr.rel (%p133) target = $region16
        $region15: #{tpu_custom_call.1} parent=11 // pred_region
          %s136 = smul.u32 16, %s27
          %s138 = ssub.s32 2048, 2048
          %139 = vsyncadd [#allocation7], %s138
          %s140 = sadd.s32 %s26, %s136
          %s141 = smul.addr %s140, 128
          %s142 = scalar_lea.hbm %s1, %s141
          %s143 = sshll.u32 [#allocation6], 4
          %s144 = int_to_ptr.vmem [resolvable:$true] %s143
          %149 = dma.hbm_to_vmem [thread:$0]  %s142, 2048, %s144, [#allocation7], 128, 128, 8
        $region16: #{tpu_custom_call.1} parent=11 // pred_fallthru
          _
      $region12: #{tpu_custom_call.1} parent=5 // pred_fallthru
        _
      %p150 = scmp.lt.s32.totalorder %s15, 2
      // Predicated region
      $region17: #{tpu_custom_call.1} parent=5 // pred_check
        %p151 = pneg %p150
      $region18: #{tpu_custom_call.1} parent=5 // pred_check_branch
        %153 = sbr.rel (%p151) target = $region20
      $region19: #{tpu_custom_call.1} parent=5 // pred_region
        // Predicated region
        $region21: #{tpu_custom_call.1} parent=19 // pred_check
          %p154 = pneg %p56
        $region22: #{tpu_custom_call.1} parent=19 // pred_check_branch
          %156 = sbr.rel (%p154) target = $region24
        $region23: #{tpu_custom_call.1} parent=19 // pred_region
          %s157 = sand.u32 %s46, 1
          %s158 = scalar_lea.sflag [#allocation4], %s157
          %s159 = sand.u32 %s46, 1
          %s160 = smul.addr %s159, 128
          %s161 = scalar_lea.vmem [#allocation3], %s160
          %s162 = smul.u32 16, %s22
          %s164 = ssub.s32 2048, 2048
          %165 = vsyncadd %s158, %s164
          %s166 = sadd.s32 %s24, %s162
          %s167 = smul.addr %s166, 128
          %s168 = scalar_lea.hbm %s0, %s167
          %s169 = sshll.u32 %s161, 4
          %s170 = int_to_ptr.vmem [resolvable:$true] %s169
          %175 = dma.hbm_to_vmem [thread:$0]  %s168, 2048, %s170, %s158, 128, 128, 8
        $region24: #{tpu_custom_call.1} parent=19 // pred_fallthru
          _
      $region20: #{tpu_custom_call.1} parent=5 // pred_fallthru
        _
      %p176 = scmp.le.s32.totalorder 1, %s15
      %p177 = scmp.lt.s32.totalorder %s15, 3
      %p178 = pnand %p176, %p177
      %p179 = pneg %p178
      // Predicated region
      $region25: #{tpu_custom_call.1} parent=5 // pred_check
        _
      $region26: #{tpu_custom_call.1} parent=5 // pred_check_branch
        %181 = sbr.rel (%p178) target = $region28
      $region27: #{tpu_custom_call.1} parent=5 // pred_region
        %s182 = ssub.s32 %s15, 1
        %s183 = sand.u32 %s49, 1
        %s184 = scalar_lea.sflag [#allocation4], %s183
        %s185 = sand.u32 %s49, 1
        %s186 = smul.addr %s185, 128
        %s187 = scalar_lea.vmem [#allocation3], %s186
        // Predicated region
        $region29: #{tpu_custom_call.1} parent=27 // pred_check
          %p188 = pneg %p62
        $region30: #{tpu_custom_call.1} parent=27 // pred_check_branch
          %190 = sbr.rel (%p188) target = $region32
        $region31: #{tpu_custom_call.1} parent=27 // pred_region
          %191 = dma.done %s184, 2048
        $region32: #{tpu_custom_call.1} parent=27 // pred_fallthru
          _
        // Predicated region
        $region33: #{tpu_custom_call.1} parent=27 // pred_check
          %p192 = pneg %p90
        $region34: #{tpu_custom_call.1} parent=27 // pred_check_branch
          %194 = sbr.rel (%p192) target = $region36
        $region35: #{tpu_custom_call.1} parent=27 // pred_region
          %195 = dma.done [#allocation7], 2048
        $region36: #{tpu_custom_call.1} parent=27 // pred_fallthru
          _
        %s196 = sand.u32 %s49, 1
        %s197 = scalar_lea.sflag [#allocation4], %s196
        %s198 = sand.u32 %s49, 1
        %s199 = smul.addr %s198, 128
        %s200 = scalar_lea.vmem [#allocation3], %s199
        %p201 = pneg %p62
        %p202 = pneg %p59
        %p203 = pneg %p90
        %p204 = pneg %p87
        %p205 = pneg %p118
        %p206 = pneg %p115
        %s207 = sand.u32 %s105, 1
        %s208 = scalar_lea.sflag [#allocation5], %s207
        %s209 = sand.u32 %s105, 1
        %s210 = smul.addr %s209, 64
        %s211 = scalar_lea.vmem [#allocation8], %s210
        %s212 = smul.u32 16, %s25
        %s213 = smul.u32 16, %s27
        %s214 = smul.u32 16, %s25
        %p216 = scmp.eq.s32.totalorder %s27, 0
        // Predicated region
        $region37: #{tpu_custom_call.1} parent=27 // pred_check
          %p217 = pneg %p216
        $region38: #{tpu_custom_call.1} parent=27 // pred_check_branch
          %219 = sbr.rel (%p217) target = $region40
        $region39: #{tpu_custom_call.1} parent=27 // pred_region
          %220 = vst [vmem:[#allocation2] sm:$0xff] 0.0
          %221 = vst [vmem:[#allocation2 + $0x8] sm:$0xff] 0.0
          %222 = vst [vmem:[#allocation2 + $0x10] sm:$0xff] 0.0
          %223 = vst [vmem:[#allocation2 + $0x18] sm:$0xff] 0.0
          %224 = vst [vmem:[#allocation2 + $0x20] sm:$0xff] 0.0
          %225 = vst [vmem:[#allocation2 + $0x28] sm:$0xff] 0.0
          %226 = vst [vmem:[#allocation2 + $0x30] sm:$0xff] 0.0
          %227 = vst [vmem:[#allocation2 + $0x38] sm:$0xff] 0.0
          %228 = vst [vmem:[#allocation2 + $0x40] sm:$0xff] 0.0
          %229 = vst [vmem:[#allocation2 + $0x48] sm:$0xff] 0.0
          %230 = vst [vmem:[#allocation2 + $0x50] sm:$0xff] 0.0
          %231 = vst [vmem:[#allocation2 + $0x58] sm:$0xff] 0.0
          %232 = vst [vmem:[#allocation2 + $0x60] sm:$0xff] 0.0
          %233 = vst [vmem:[#allocation2 + $0x68] sm:$0xff] 0.0
          %234 = vst [vmem:[#allocation2 + $0x70] sm:$0xff] 0.0
          %235 = vst [vmem:[#allocation2 + $0x78] sm:$0xff] 0.0
        $region40: #{tpu_custom_call.1} parent=27 // pred_fallthru
          _
        %v236 = vld [vmem:[#allocation2] sm:$0xff]
        %v237 = vld [vmem:[#allocation2 + $0x8] sm:$0xff]
        %v238 = vld [vmem:[#allocation2 + $0x10] sm:$0xff]
        %v239 = vld [vmem:[#allocation2 + $0x18] sm:$0xff]
        %v240 = vld [vmem:[#allocation2 + $0x20] sm:$0xff]
        %v241 = vld [vmem:[#allocation2 + $0x28] sm:$0xff]
        %v242 = vld [vmem:[#allocation2 + $0x30] sm:$0xff]
        %v243 = vld [vmem:[#allocation2 + $0x38] sm:$0xff]
        %v244 = vld [vmem:[#allocation2 + $0x40] sm:$0xff]
        %v245 = vld [vmem:[#allocation2 + $0x48] sm:$0xff]
        %v246 = vld [vmem:[#allocation2 + $0x50] sm:$0xff]
        %v247 = vld [vmem:[#allocation2 + $0x58] sm:$0xff]
        %v248 = vld [vmem:[#allocation2 + $0x60] sm:$0xff]
        %v249 = vld [vmem:[#allocation2 + $0x68] sm:$0xff]
        %v250 = vld [vmem:[#allocation2 + $0x70] sm:$0xff]
        %v251 = vld [vmem:[#allocation2 + $0x78] sm:$0xff]
        %v252 = vld [vmem:[%s187] sm:$0xff]
        %v253 = vld [vmem:[%s187 + $0x8] sm:$0xff]
        %v254 = vld [vmem:[%s187 + $0x10] sm:$0xff]
        %v255 = vld [vmem:[%s187 + $0x18] sm:$0xff]
        %v256 = vld [vmem:[%s187 + $0x20] sm:$0xff]
        %v257 = vld [vmem:[%s187 + $0x28] sm:$0xff]
        %v258 = vld [vmem:[%s187 + $0x30] sm:$0xff]
        %v259 = vld [vmem:[%s187 + $0x38] sm:$0xff]
        %v260 = vld [vmem:[%s187 + $0x40] sm:$0xff]
        %v261 = vld [vmem:[%s187 + $0x48] sm:$0xff]
        %v262 = vld [vmem:[%s187 + $0x50] sm:$0xff]
        %v263 = vld [vmem:[%s187 + $0x58] sm:$0xff]
        %v264 = vld [vmem:[%s187 + $0x60] sm:$0xff]
        %v265 = vld [vmem:[%s187 + $0x68] sm:$0xff]
        %v266 = vld [vmem:[%s187 + $0x70] sm:$0xff]
        %v267 = vld [vmem:[%s187 + $0x78] sm:$0xff]
        %v268 = vpack.c.bf16 %v253, %v252
        %v269 = vpack.c.bf16 %v255, %v254
        %v270 = vpack.c.bf16 %v257, %v256
        %v271 = vpack.c.bf16 %v259, %v258
        %v272 = vpack.c.bf16 %v261, %v260
        %v273 = vpack.c.bf16 %v263, %v262
        %v274 = vpack.c.bf16 %v265, %v264
        %v275 = vpack.c.bf16 %v267, %v266
        %v276 = vld [vmem:[#allocation6] sm:$0xff]
        %v277 = vld [vmem:[#allocation6 + $0x8] sm:$0xff]
        %v278 = vld [vmem:[#allocation6 + $0x10] sm:$0xff]
        %v279 = vld [vmem:[#allocation6 + $0x18] sm:$0xff]
        %v280 = vld [vmem:[#allocation6 + $0x20] sm:$0xff]
        %v281 = vld [vmem:[#allocation6 + $0x28] sm:$0xff]
        %v282 = vld [vmem:[#allocation6 + $0x30] sm:$0xff]
        %v283 = vld [vmem:[#allocation6 + $0x38] sm:$0xff]
        %v284 = vld [vmem:[#allocation6 + $0x40] sm:$0xff]
        %v285 = vld [vmem:[#allocation6 + $0x48] sm:$0xff]
        %v286 = vld [vmem:[#allocation6 + $0x50] sm:$0xff]
        %v287 = vld [vmem:[#allocation6 + $0x58] sm:$0xff]
        %v288 = vld [vmem:[#allocation6 + $0x60] sm:$0xff]
        %v289 = vld [vmem:[#allocation6 + $0x68] sm:$0xff]
        %v290 = vld [vmem:[#allocation6 + $0x70] sm:$0xff]
        %v291 = vld [vmem:[#allocation6 + $0x78] sm:$0xff]
        %v292 = vpack.c.bf16 %v277, %v276
        %v293 = vpack.c.bf16 %v279, %v278
        %v294 = vpack.c.bf16 %v281, %v280
        %v295 = vpack.c.bf16 %v283, %v282
        %v296 = vpack.c.bf16 %v285, %v284
        %v297 = vpack.c.bf16 %v287, %v286
        %v298 = vpack.c.bf16 %v289, %v288
        %v299 = vpack.c.bf16 %v291, %v290
        %300 = vmatprep.subr.bf16.mxu0 0
        %301 = vmatpush1.bf16.msra.mxu0 %v292
        %302 = vmatprep.subr.bf16.mxu0 0
        %303 = vmatpush1.bf16.msra.mxu0 %v293
        %304 = vmatprep.subr.bf16.mxu0 0
        %305 = vmatpush1.bf16.msra.mxu0 %v294
        %306 = vmatprep.subr.bf16.mxu0 0
        %307 = vmatpush1.bf16.msra.mxu0 %v295
        %308 = vmatprep.subr.bf16.mxu0 0
        %309 = vmatpush1.bf16.msra.mxu0 %v296
        %310 = vmatprep.subr.bf16.mxu0 0
        %311 = vmatpush1.bf16.msra.mxu0 %v297
        %312 = vmatprep.subr.bf16.mxu0 0
        %313 = vmatpush1.bf16.msra.mxu0 %v298
        %314 = vmatprep.subr.bf16.mxu0 0
        %315 = vmatpush1.bf16.msra.mxu0 %v299
        %316 = vmatprep.subr.bf16.mxu0 0
        %317 = vmatpush1.bf16.msra.mxu0 0
        %318 = vmatprep.subr.bf16.mxu0 0
        %319 = vmatpush1.bf16.msra.mxu0 0
        %320 = vmatprep.subr.bf16.mxu0 0
        %321 = vmatpush1.bf16.msra.mxu0 0
        %322 = vmatprep.subr.bf16.mxu0 0
        %323 = vmatpush1.bf16.msra.mxu0 0
        %324 = vmatprep.subr.bf16.mxu0 0
        %325 = vmatpush1.bf16.msra.mxu0 0
        %326 = vmatprep.subr.bf16.mxu0 0
        %327 = vmatpush1.bf16.msra.mxu0 0
        %328 = vmatprep.subr.bf16.mxu0 0
        %329 = vmatpush1.bf16.msra.mxu0 0
        %330 = vmatprep.subr.bf16.mxu0 0
        %331 = vmatpush1.bf16.msra.mxu0 0
        %332 = vmatprep.mubr.bf16.mxu0 0
        %333 = vmatmul.mubr.bf16.gmra.mrb[0].mxu0 %v268
        %v334 = vpop.f32.mrb[0].mxu0
        %v335 = vadd.f32 0.0, %v334
        %v336 = vpop.f32.mrb[0].mxu0
        %v337 = vpop.f32.mrb[0].mxu0
        %v338 = vadd.f32 0.0, %v337
        %v339 = vpop.f32.mrb[0].mxu0
        %340 = vmatprep.mubr.bf16.mxu0 0
        %341 = vmatmul.mubr.bf16.gmra.mrb[0].mxu0 %v269
        %v342 = vpop.f32.mrb[0].mxu0
        %v343 = vadd.f32 0.0, %v342
        %v344 = vpop.f32.mrb[0].mxu0
        %v345 = vpop.f32.mrb[0].mxu0
        %v346 = vadd.f32 0.0, %v345
        %v347 = vpop.f32.mrb[0].mxu0
        %348 = vmatprep.mubr.bf16.mxu0 0
        %349 = vmatmul.mubr.bf16.gmra.mrb[0].mxu0 %v270
        %v350 = vpop.f32.mrb[0].mxu0
        %v351 = vadd.f32 0.0, %v350
        %v352 = vpop.f32.mrb[0].mxu0
        %v353 = vpop.f32.mrb[0].mxu0
        %v354 = vadd.f32 0.0, %v353
        %v355 = vpop.f32.mrb[0].mxu0
        %356 = vmatprep.mubr.bf16.mxu0 0
        %357 = vmatmul.mubr.bf16.gmra.mrb[0].mxu0 %v271
        %v358 = vpop.f32.mrb[0].mxu0
        %v359 = vadd.f32 0.0, %v358
        %v360 = vpop.f32.mrb[0].mxu0
        %v361 = vpop.f32.mrb[0].mxu0
        %v362 = vadd.f32 0.0, %v361
        %v363 = vpop.f32.mrb[0].mxu0
        %364 = vmatprep.mubr.bf16.mxu0 0
        %365 = vmatmul.mubr.bf16.gmra.mrb[0].mxu0 %v272
        %v366 = vpop.f32.mrb[0].mxu0
        %v367 = vadd.f32 0.0, %v366
        %v368 = vpop.f32.mrb[0].mxu0
        %v369 = vpop.f32.mrb[0].mxu0
        %v370 = vadd.f32 0.0, %v369
        %v371 = vpop.f32.mrb[0].mxu0
        %372 = vmatprep.mubr.bf16.mxu0 0
        %373 = vmatmul.mubr.bf16.gmra.mrb[0].mxu0 %v273
        %v374 = vpop.f32.mrb[0].mxu0
        %v375 = vadd.f32 0.0, %v374
        %v376 = vpop.f32.mrb[0].mxu0
        %v377 = vpop.f32.mrb[0].mxu0
        %v378 = vadd.f32 0.0, %v377
        %v379 = vpop.f32.mrb[0].mxu0
        %380 = vmatprep.mubr.bf16.mxu0 0
        %381 = vmatmul.mubr.bf16.gmra.mrb[0].mxu0 %v274
        %v382 = vpop.f32.mrb[0].mxu0
        %v383 = vadd.f32 0.0, %v382
        %v384 = vpop.f32.mrb[0].mxu0
        %v385 = vpop.f32.mrb[0].mxu0
        %v386 = vadd.f32 0.0, %v385
        %v387 = vpop.f32.mrb[0].mxu0
        %388 = vmatprep.mubr.bf16.mxu0 0
        %389 = vmatmul.mubr.bf16.gmra.mrb[0].mxu0 %v275
        %v390 = vpop.f32.mrb[0].mxu0
        %v391 = vadd.f32 0.0, %v390
        %v392 = vpop.f32.mrb[0].mxu0
        %v393 = vpop.f32.mrb[0].mxu0
        %v394 = vadd.f32 0.0, %v393
        %v395 = vpop.f32.mrb[0].mxu0
        %396 = vdwg.mxu0
        %v397 = vadd.f32 %v236, %v335
        %v398 = vadd.f32 %v237, %v338
        %v399 = vadd.f32 %v238, %v343
        %v400 = vadd.f32 %v239, %v346
        %v401 = vadd.f32 %v240, %v351
        %v402 = vadd.f32 %v241, %v354
        %v403 = vadd.f32 %v242, %v359
        %v404 = vadd.f32 %v243, %v362
        %v405 = vadd.f32 %v244, %v367
        %v406 = vadd.f32 %v245, %v370
        %v407 = vadd.f32 %v246, %v375
        %v408 = vadd.f32 %v247, %v378
        %v409 = vadd.f32 %v248, %v383
        %v410 = vadd.f32 %v249, %v386
        %v411 = vadd.f32 %v250, %v391
        %v412 = vadd.f32 %v251, %v394
        %413 = vst [vmem:[#allocation2] sm:$0xff] %v397
        %414 = vst [vmem:[#allocation2 + $0x8] sm:$0xff] %v398
        %415 = vst [vmem:[#allocation2 + $0x10] sm:$0xff] %v399
        %416 = vst [vmem:[#allocation2 + $0x18] sm:$0xff] %v400
        %417 = vst [vmem:[#allocation2 + $0x20] sm:$0xff] %v401
        %418 = vst [vmem:[#allocation2 + $0x28] sm:$0xff] %v402
        %419 = vst [vmem:[#allocation2 + $0x30] sm:$0xff] %v403
        %420 = vst [vmem:[#allocation2 + $0x38] sm:$0xff] %v404
        %421 = vst [vmem:[#allocation2 + $0x40] sm:$0xff] %v405
        %422 = vst [vmem:[#allocation2 + $0x48] sm:$0xff] %v406
        %423 = vst [vmem:[#allocation2 + $0x50] sm:$0xff] %v407
        %424 = vst [vmem:[#allocation2 + $0x58] sm:$0xff] %v408
        %425 = vst [vmem:[#allocation2 + $0x60] sm:$0xff] %v409
        %426 = vst [vmem:[#allocation2 + $0x68] sm:$0xff] %v410
        %427 = vst [vmem:[#allocation2 + $0x70] sm:$0xff] %v411
        %428 = vst [vmem:[#allocation2 + $0x78] sm:$0xff] %v412
        // Predicated region
        $region41: #{tpu_custom_call.1} parent=27 // pred_check
          %p429 = pneg %p216
        $region42: #{tpu_custom_call.1} parent=27 // pred_check_branch
          %431 = sbr.rel (%p429) target = $region44
        $region43: #{tpu_custom_call.1} parent=27 // pred_region
          %v432 = vld [vmem:[#allocation2] sm:$0xff]
          %v433 = vld [vmem:[#allocation2 + $0x8] sm:$0xff]
          %v434 = vld [vmem:[#allocation2 + $0x10] sm:$0xff]
          %v435 = vld [vmem:[#allocation2 + $0x18] sm:$0xff]
          %v436 = vld [vmem:[#allocation2 + $0x20] sm:$0xff]
          %v437 = vld [vmem:[#allocation2 + $0x28] sm:$0xff]
          %v438 = vld [vmem:[#allocation2 + $0x30] sm:$0xff]
          %v439 = vld [vmem:[#allocation2 + $0x38] sm:$0xff]
          %v440 = vld [vmem:[#allocation2 + $0x40] sm:$0xff]
          %v441 = vld [vmem:[#allocation2 + $0x48] sm:$0xff]
          %v442 = vld [vmem:[#allocation2 + $0x50] sm:$0xff]
          %v443 = vld [vmem:[#allocation2 + $0x58] sm:$0xff]
          %v444 = vld [vmem:[#allocation2 + $0x60] sm:$0xff]
          %v445 = vld [vmem:[#allocation2 + $0x68] sm:$0xff]
          %v446 = vld [vmem:[#allocation2 + $0x70] sm:$0xff]
          %v447 = vld [vmem:[#allocation2 + $0x78] sm:$0xff]
          %v448 = vpack.c.bf16 %v433, %v432
          %v449 = vpack.c.bf16 %v435, %v434
          %v450 = vpack.c.bf16 %v437, %v436
          %v451 = vpack.c.bf16 %v439, %v438
          %v452 = vpack.c.bf16 %v441, %v440
          %v453 = vpack.c.bf16 %v443, %v442
          %v454 = vpack.c.bf16 %v445, %v444
          %v455 = vpack.c.bf16 %v447, %v446
          %v464 = vunpack.c.l.b16 %v448
          %v465 = vunpack.c.h.b16 %v448
          %v466 = vunpack.c.l.b16 %v449
          %v467 = vunpack.c.h.b16 %v449
          %v468 = vunpack.c.l.b16 %v450
          %v469 = vunpack.c.h.b16 %v450
          %v470 = vunpack.c.l.b16 %v451
          %v471 = vunpack.c.h.b16 %v451
          %v472 = vunpack.c.l.b16 %v452
          %v473 = vunpack.c.h.b16 %v452
          %v474 = vunpack.c.l.b16 %v453
          %v475 = vunpack.c.h.b16 %v453
          %v476 = vunpack.c.l.b16 %v454
          %v477 = vunpack.c.h.b16 %v454
          %v478 = vunpack.c.l.b16 %v455
          %v479 = vunpack.c.h.b16 %v455
          %v480 = vpack.c.b16 %v464, %v464
          %v481 = vpack.c.b16 %v465, %v465
          %v482 = vpack.c.b16 %v466, %v466
          %v483 = vpack.c.b16 %v467, %v467
          %v484 = vpack.c.b16 %v468, %v468
          %v485 = vpack.c.b16 %v469, %v469
          %v486 = vpack.c.b16 %v470, %v470
          %v487 = vpack.c.b16 %v471, %v471
          %v488 = vpack.c.b16 %v472, %v472
          %v489 = vpack.c.b16 %v473, %v473
          %v490 = vpack.c.b16 %v474, %v474
          %v491 = vpack.c.b16 %v475, %v475
          %v492 = vpack.c.b16 %v476, %v476
          %v493 = vpack.c.b16 %v477, %v477
          %v494 = vpack.c.b16 %v478, %v478
          %v495 = vpack.c.b16 %v479, %v479
          %512 = vst [vmem:[%s211] sm:$0xf] %v480
          %513 = vst [vmem:[%s211 + $0x4] sm:$0xf] %v481
          %514 = vst [vmem:[%s211 + $0x8] sm:$0xf] %v482
          %515 = vst [vmem:[%s211 + $0xc] sm:$0xf] %v483
          %516 = vst [vmem:[%s211 + $0x10] sm:$0xf] %v484
          %517 = vst [vmem:[%s211 + $0x14] sm:$0xf] %v485
          %518 = vst [vmem:[%s211 + $0x18] sm:$0xf] %v486
          %519 = vst [vmem:[%s211 + $0x1c] sm:$0xf] %v487
          %520 = vst [vmem:[%s211 + $0x20] sm:$0xf] %v488
          %521 = vst [vmem:[%s211 + $0x24] sm:$0xf] %v489
          %522 = vst [vmem:[%s211 + $0x28] sm:$0xf] %v490
          %523 = vst [vmem:[%s211 + $0x2c] sm:$0xf] %v491
          %524 = vst [vmem:[%s211 + $0x30] sm:$0xf] %v492
          %525 = vst [vmem:[%s211 + $0x34] sm:$0xf] %v493
          %526 = vst [vmem:[%s211 + $0x38] sm:$0xf] %v494
          %527 = vst [vmem:[%s211 + $0x3c] sm:$0xf] %v495
        $region44: #{tpu_custom_call.1} parent=27 // pred_fallthru
          _
        %s528 = sand.u32 %s105, 1
        %s529 = scalar_lea.sflag [#allocation5], %s528
        %s530 = sand.u32 %s105, 1
        %s531 = smul.addr %s530, 64
        %s532 = scalar_lea.vmem [#allocation8], %s531
        // Predicated region
        $region45: #{tpu_custom_call.1} parent=27 // pred_check
          %p533 = pneg %p115
        $region46: #{tpu_custom_call.1} parent=27 // pred_check_branch
          %535 = sbr.rel (%p533) target = $region48
        $region47: #{tpu_custom_call.1} parent=27 // pred_region
          %s536 = smul.u32 16, %s25
          %s538 = ssub.s32 1024, 1024
          %539 = vsyncadd %s529, %s538
          %s540 = sadd.s32 %s26, %s536
          %s541 = smul.addr %s540, 64
          %s542 = scalar_lea.hbm %s2, %s541
          %s543 = sshll.u32 %s532, 4
          %s544 = int_to_ptr.vmem [resolvable:$true] %s543
          %549 = dma.vmem_to_hbm [thread:$0]  %s544, 1024, %s542, %s529, 64, 64, 4
        $region48: #{tpu_custom_call.1} parent=27 // pred_fallthru
          _
      $region28: #{tpu_custom_call.1} parent=5 // pred_fallthru
        _
      %p550 = scmp.le.s32.totalorder 2, %s15
      // Predicated region
      $region49: #{tpu_custom_call.1} parent=5 // pred_check
        %p551 = pneg %p550
      $region50: #{tpu_custom_call.1} parent=5 // pred_check_branch
        %553 = sbr.rel (%p551) target = $region52
      $region51: #{tpu_custom_call.1} parent=5 // pred_region
        %s554 = ssub.s32 %s15, 2
        // Predicated region
        $region53: #{tpu_custom_call.1} parent=51 // pred_check
          %p555 = pneg %p121
        $region54: #{tpu_custom_call.1} parent=51 // pred_check_branch
          %557 = sbr.rel (%p555) target = $region56
        $region55: #{tpu_custom_call.1} parent=51 // pred_region
          %s558 = sand.u32 %s106, 1
          %s559 = scalar_lea.sflag [#allocation5], %s558
          %s560 = sand.u32 %s106, 1
          %s561 = smul.addr %s560, 64
          %s562 = scalar_lea.vmem [#allocation8], %s561
          %563 = dma.done %s559, 1024
        $region56: #{tpu_custom_call.1} parent=51 // pred_fallthru
          _
      $region52: #{tpu_custom_call.1} parent=5 // pred_fallthru
        _
    $region6: #{tpu_custom_call.1} parent=1 // loop_footer
      %s19 = sadd.s32 1, %s15
    $region7: #{tpu_custom_call.1} parent=1 // loop_footer_branch
      %14 = sbr.rel target = $region3
    $region8: #{tpu_custom_call.1} parent=1 // loop_exit
      _
    %564 = vsyncpa [#allocation4], 1
    %s565 = scalar_lea.sflag [#allocation4], 1
    %566 = vsyncpa %s565, 1
    %567 = vsyncpa [#allocation7], 1
    %568 = vsyncpa [#allocation5], 1
    %s569 = scalar_lea.sflag [#allocation5], 1
    %570 = vsyncpa %s569, 1

</llo_original>
